<compile_context>
chip_gen: v6e
topology: v6e:2x2x1
jax: 0.10.0
libtpu: 0.0.40
codegen_flags: <defaults>
</compile_context>

<pallas_src>
import jax
import jax.numpy as jnp
from jax.experimental import pallas as pl
from jax.experimental.pallas import tpu as pltpu


# ----------------------------------------------------------------------------
# Kernel
# ----------------------------------------------------------------------------
def t5_gated_dense_kernel(x_ref, wi_ref, wo_ref, o_ref, acc_ref):
    k = pl.program_id(1)
    nk = pl.num_programs(1)

    @pl.when(k == 0)
    def _():
        acc_ref[...] = jnp.zeros_like(acc_ref)

    x = x_ref[...]                                   # (tm, D), native dtype

    # Fused stage-1 projection for this d_ff chunk: one MXU matmul producing
    # [x@wi0_k | x@wi1_k], f32 accumulation on the MXU.
    h = jnp.dot(x, wi_ref[...], preferred_element_type=jnp.float32)  # (tm, 2*tk)
    tk = wo_ref.shape[0]
    h_act = h[:, :tk]
    h_lin = h[:, tk:]
    g = jnp.maximum(h_act, 0.0) * h_lin              # ReLU gate (f32 VPU math)
    # Dropout is identity in eval mode.              # TODO(synk): training-mode dropout not implemented

    # Partial output projection for this chunk, accumulated in f32.
    acc_ref[...] += jnp.dot(g.astype(wo_ref.dtype), wo_ref[...],
                            preferred_element_type=jnp.float32)

    @pl.when(k == nk - 1)
    def _():
        o_ref[...] = acc_ref[...].astype(o_ref.dtype)


# ----------------------------------------------------------------------------
# Tile / VMEM selection helpers
# ----------------------------------------------------------------------------
def _round_up(x, m):
    return ((x + m - 1) // m) * m


def _vmem_budget_bytes():
    """Per-generation usable VMEM budget (with headroom for Mosaic scratch)."""
    cap = None
    try:
        cap = getattr(pltpu.get_tpu_info(), "vmem_capacity_bytes", None)
    except Exception:
        cap = None
    if cap is None:
        try:
            kind = jax.devices()[0].device_kind.lower()
        except Exception:
            kind = ""
        cap = (64 if "v7" in kind else 128) * 1024 * 1024
    if cap <= 64 * 1024 * 1024:
        # v7x-class: 64 MiB per TC; leave headroom for internal scratch.
        return min(cap - 8 * 1024 * 1024, 56 * 1024 * 1024)
    # v5e / v6e: 128 MiB physical; don't artificially cap at 64 MiB.
    return min(cap - 28 * 1024 * 1024, 100 * 1024 * 1024)


def _vmem_bytes_estimate(tm, tk, D, act_isz, w_isz):
    x_tile = 2 * tm * D * act_isz            # double-buffered input rows
    wi_tile = 2 * (D * 2 * tk) * w_isz       # double-buffered fused wi chunk
    wo_tile = 2 * (tk * D) * w_isz           # double-buffered wo chunk
    out_tile = 2 * tm * D * act_isz          # double-buffered output rows
    acc = tm * D * 4                         # f32 accumulator scratch
    interm = 16 * tm * tk                    # h / gate f32 intermediates headroom
    return x_tile + wi_tile + wo_tile + out_tile + acc + interm


def _select_tiles(N, D, d_ff, act_isz, w_isz, row_align, budget, tm_hint, tk_hint):
    """Pick (tm, tk): prefer the largest row tile, then weights-resident tk."""
    n_cap = _round_up(max(N, 1), row_align)

    if tm_hint is not None:
        tm_list = [max(row_align, min(_round_up(tm_hint, row_align), n_cap))]
    else:
        tm_list = []
        for t in (1024, 512, 384, 256, 128, 64, 32, 16, 8):
            t = max(row_align, (min(t, n_cap) // row_align) * row_align)
            if t not in tm_list:
                tm_list.append(t)

    if tk_hint is not None:
        tks = [tk_hint]
    else:
        tks = [d_ff]                          # weights-resident fast path first
        if d_ff % 128 == 0:
            t = (min(2048, d_ff) // 128) * 128
            while t >= 128:
                if d_ff % t == 0 and t != d_ff:
                    tks.append(t)
                t -= 128

    for tm in tm_list:                        # largest tm first (main lever)
        for tk in tks:                        # resident tk first
            if _vmem_bytes_estimate(tm, tk, D, act_isz, w_isz) <= budget:
                return tm, tk
    return tm_list[-1], tks[-1]               # best effort fallback


# ----------------------------------------------------------------------------
# Wrapper
# ----------------------------------------------------------------------------
def t5_dense_gated_act_dense(hidden_states, wi_0, wi_1, wo, *, tm=None, tk=None):
    """hidden_states: [B, S, D]; wi_0, wi_1: [D, d_ff]; wo: [d_ff, D]."""
    B, S, D = hidden_states.shape
    d_ff = wi_0.shape[1]
    assert wi_1.shape == (D, d_ff) and wo.shape == (d_ff, D)
    N = B * S

    act_isz = jnp.dtype(hidden_states.dtype).itemsize
    w_isz = jnp.dtype(wi_0.dtype).itemsize
    # Sublane alignment: 8 rows for 4-byte dtypes, 16 for 2-byte (packed).
    row_align = 8 if act_isz >= 4 else 16

    budget = _vmem_budget_bytes()
    tm, tk = _select_tiles(N, D, d_ff, act_isz, w_isz, row_align, budget, tm, tk)
    assert d_ff % tk == 0, "tk must divide d_ff"
    nk = d_ff // tk

    # When weights are fully resident and there would be only one row tile,
    # halve tm so both TensorCores (v7x) get a grid step.  Cheap on 1-TC
    # chips (one extra ~0.35us pipeline step; weights are not re-DMA'd).
    if nk == 1 and pl.cdiv(N, tm) == 1 and tm >= 2 * row_align and N > row_align:
        tm = max(row_align, (tm // 2 // row_align) * row_align)

    N_pad = _round_up(N, tm)

    x2d = hidden_states.reshape(N, D)
    if N_pad != N:
        x2d = jnp.pad(x2d, ((0, N_pad - N), (0, 0)))   # zero rows -> zero output

    # Fuse wi_0 / wi_1 so stage 1 is one MXU matmul and one DMA stream per
    # d_ff chunk: columns [k*2tk, k*2tk+tk) hold wi_0 chunk k and
    # [k*2tk+tk, (k+1)*2tk) hold wi_1 chunk k.  (Done once in the wrapper;
    # in production this interleave would be precomputed with the weights.)
    wi_cat = jnp.concatenate(
        [wi_0.reshape(D, nk, tk), wi_1.reshape(D, nk, tk)], axis=2
    ).reshape(D, 2 * d_ff)

    vmem_est = _vmem_bytes_estimate(tm, tk, D, act_isz, w_isz)
    vmem_limit = int(min(max(int(1.25 * vmem_est), 32 * 1024 * 1024), budget))

    out2d = pl.pallas_call(
        t5_gated_dense_kernel,
        out_shape=jax.ShapeDtypeStruct((N_pad, D), hidden_states.dtype),
        grid_spec=pltpu.PrefetchScalarGridSpec(
            num_scalar_prefetch=0,
            grid=(N_pad // tm, nk),
            in_specs=[
                pl.BlockSpec((tm, D), lambda i, k: (i, 0)),      # x rows (constant over k)
                pl.BlockSpec((D, 2 * tk), lambda i, k: (0, k)),  # fused [wi_0 | wi_1] chunk
                pl.BlockSpec((tk, D), lambda i, k: (k, 0)),      # wo chunk
            ],
            out_specs=pl.BlockSpec((tm, D), lambda i, k: (i, 0)),
            scratch_shapes=[pltpu.VMEM((tm, D), jnp.float32)],
        ),
        compiler_params=pltpu.CompilerParams(
            dimension_semantics=("parallel", "arbitrary"),
            vmem_limit_bytes=vmem_limit,
        ),
    )(x2d, wi_cat, wo)

    if N_pad != N:
        out2d = out2d[:N]
    return out2d.reshape(B, S, D)


# ----------------------------------------------------------------------------
# Reference
# ----------------------------------------------------------------------------
def reference_t5_dense_gated_act_dense(hidden_states, wi_0, wi_1, wo):
    x = hidden_states.astype(jnp.float32)
    h_act = jnp.maximum(x @ wi_0.astype(jnp.float32), 0.0)
    h_lin = x @ wi_1.astype(jnp.float32)
    y = (h_act * h_lin) @ wo.astype(jnp.float32)
    return y.astype(hidden_states.dtype)


if __name__ == "__main__":
    key = jax.random.PRNGKey(0)
    kx, k0, k1, k2, kx2, k3, k4, k5 = jax.random.split(key, 8)

    # Test 1: small T5-ish config (weights-resident single-k fast path).
    B, S, D, d_ff = 2, 8, 32, 64
    hidden_states = jax.random.normal(kx, (B, S, D), dtype=jnp.float32)
    wi_0 = jax.random.normal(k0, (D, d_ff), dtype=jnp.float32) * 0.05
    wi_1 = jax.random.normal(k1, (D, d_ff), dtype=jnp.float32) * 0.05
    wo = jax.random.normal(k2, (d_ff, D), dtype=jnp.float32) * 0.05

    out = jax.block_until_ready(t5_dense_gated_act_dense(hidden_states, wi_0, wi_1, wo))
    ref = reference_t5_dense_gated_act_dense(hidden_states, wi_0, wi_1, wo)
    assert out.shape == (B, S, D)
    assert jnp.allclose(out, ref, atol=1e-4, rtol=1e-4), "test 1 mismatch"

    # Test 2: exercises the d_ff-chunked accumulator path and row padding
    # (N = 2*13 = 26 is not a multiple of the forced tm = 16).
    B2, S2, D2, dff2 = 2, 13, 128, 256
    x2 = jax.random.normal(kx2, (B2, S2, D2), dtype=jnp.float32)
    w0 = jax.random.normal(k3, (D2, dff2), dtype=jnp.float32) * 0.05
    w1 = jax.random.normal(k4, (D2, dff2), dtype=jnp.float32) * 0.05
    w2 = jax.random.normal(k5, (dff2, D2), dtype=jnp.float32) * 0.05

    out2 = jax.block_until_ready(
        t5_dense_gated_act_dense(x2, w0, w1, w2, tm=16, tk=128))
    ref2 = reference_t5_dense_gated_act_dense(x2, w0, w1, w2)
    assert out2.shape == (B2, S2, D2)
    assert jnp.allclose(out2, ref2, atol=2e-3, rtol=2e-3), "test 2 mismatch"

    print("KERNEL_OK")
</pallas_src>

<mosaic_0001>
module attributes {stable_mosaic.version = 11 : i64} {
  func.func @t5_gated_dense_kernel(%arg0: i32, %arg1: i32, %arg2: memref<8x32xf32, #tpu.memory_space<vmem>>, %arg3: memref<32x128xf32, #tpu.memory_space<vmem>>, %arg4: memref<64x32xf32, #tpu.memory_space<vmem>>, %arg5: memref<8x32xf32, #tpu.memory_space<vmem>>, %arg6: memref<8x32xf32, #tpu.memory_space<vmem>>) attributes {dimension_semantics = [#tpu.dimension_semantics<parallel>, #tpu.dimension_semantics<arbitrary>], iteration_bounds = array<i64: 2, 1>, scalar_prefetch = 0 : i64, scratch_operands = 1 : i64, tpu.core_type = #tpu.core_type<tc>, window_params = [{transform_indices = @transform_0, window_bounds = array<i64: 8, 32>}, {transform_indices = @transform_1, window_bounds = array<i64: 32, 128>}, {transform_indices = @transform_2, window_bounds = array<i64: 64, 32>}, {transform_indices = @transform_3, window_bounds = array<i64: 8, 32>}]} {
    %c0_i32 = arith.constant 0 : i32
    %0 = arith.cmpi eq, %arg1, %c0_i32 : i32
    %1 = arith.extui %0 : i1 to i32
    %c0_i32_0 = arith.constant 0 : i32
    %2 = arith.cmpi ne, %1, %c0_i32_0 : i32
    scf.if %2 {
      %cst_14 = arith.constant 0.000000e+00 : f32
      %19 = vector.broadcast %cst_14 : f32 to vector<8x32xf32>
      %c0_15 = arith.constant 0 : index
      %c0_16 = arith.constant 0 : index
      %20 = vector.load %arg6[%c0_15, %c0_16] : memref<8x32xf32, #tpu.memory_space<vmem>>, vector<8x32xf32>
      tpu.vector_store %arg6[%c0_15, %c0_16], %19 {strides = array<i32>} : memref<8x32xf32, #tpu.memory_space<vmem>>, vector<8x32xf32>,
    } else {
    }
    %c0 = arith.constant 0 : index
    %c0_1 = arith.constant 0 : index
    %3 = vector.load %arg2[%c0, %c0_1] : memref<8x32xf32, #tpu.memory_space<vmem>>, vector<8x32xf32>
    %c0_2 = arith.constant 0 : index
    %c0_3 = arith.constant 0 : index
    %4 = vector.load %arg3[%c0_2, %c0_3] : memref<32x128xf32, #tpu.memory_space<vmem>>, vector<32x128xf32>
    %cst = arith.constant dense<0.000000e+00> : vector<8x128xf32>
    %5 = tpu.matmul %3, %4, %cst {dimension_numbers = #tpu.dot_dimension_numbers<[1], [0], [0], [1], [0, 0, 1, 1], [], []>} : vector<8x32xf32>, vector<32x128xf32>, vector<8x128xf32> -> vector<8x128xf32>
    %6 = vector.extract_strided_slice %5 {offsets = [0, 0], sizes = [8, 64], strides = [1, 1]} : vector<8x128xf32> to vector<8x64xf32>
    %7 = vector.extract_strided_slice %5 {offsets = [0, 64], sizes = [8, 64], strides = [1, 1]} : vector<8x128xf32> to vector<8x64xf32>
    %cst_4 = arith.constant 0.000000e+00 : f32
    %8 = vector.broadcast %cst_4 : f32 to vector<8x64xf32>
    %9 = arith.maximumf %6, %8 : vector<8x64xf32>
    %10 = arith.mulf %9, %7 : vector<8x64xf32>
    %c0_5 = arith.constant 0 : index
    %c0_6 = arith.constant 0 : index
    %11 = vector.load %arg6[%c0_5, %c0_6] : memref<8x32xf32, #tpu.memory_space<vmem>>, vector<8x32xf32>
    %c0_7 = arith.constant 0 : index
    %c0_8 = arith.constant 0 : index
    %12 = vector.load %arg4[%c0_7, %c0_8] : memref<64x32xf32, #tpu.memory_space<vmem>>, vector<64x32xf32>
    %cst_9 = arith.constant dense<0.000000e+00> : vector<8x32xf32>
    %13 = tpu.matmul %10, %12, %cst_9 {dimension_numbers = #tpu.dot_dimension_numbers<[1], [0], [0], [1], [0, 0, 1, 1], [], []>} : vector<8x64xf32>, vector<64x32xf32>, vector<8x32xf32> -> vector<8x32xf32>
    %14 = arith.addf %11, %13 : vector<8x32xf32>
    %c0_10 = arith.constant 0 : index
    %c0_11 = arith.constant 0 : index
    %15 = vector.load %arg6[%c0_10, %c0_11] : memref<8x32xf32, #tpu.memory_space<vmem>>, vector<8x32xf32>
    tpu.vector_store %arg6[%c0_10, %c0_11], %14 {strides = array<i32>} : memref<8x32xf32, #tpu.memory_space<vmem>>, vector<8x32xf32>,
    %c0_i32_12 = arith.constant 0 : i32
    %16 = arith.cmpi eq, %arg1, %c0_i32_12 : i32
    %17 = arith.extui %16 : i1 to i32
    %c0_i32_13 = arith.constant 0 : i32
    %18 = arith.cmpi ne, %17, %c0_i32_13 : i32
    scf.if %18 {
      %c0_14 = arith.constant 0 : index
      %c0_15 = arith.constant 0 : index
      %19 = vector.load %arg6[%c0_14, %c0_15] : memref<8x32xf32, #tpu.memory_space<vmem>>, vector<8x32xf32>
      %c0_16 = arith.constant 0 : index
      %c0_17 = arith.constant 0 : index
      %20 = vector.load %arg5[%c0_16, %c0_17] : memref<8x32xf32, #tpu.memory_space<vmem>>, vector<8x32xf32>
      tpu.vector_store %arg5[%c0_16, %c0_17], %19 {strides = array<i32>} : memref<8x32xf32, #tpu.memory_space<vmem>>, vector<8x32xf32>,
    } else {
    }
    return
  }
  func.func @transform_0(%arg0: i32, %arg1: i32) -> (i32, i32) {
    %c0_i32 = arith.constant 0 : i32
    %c0_i32_0 = arith.constant 0 : i32
    return %arg0, %c0_i32 : i32, i32
  }
  func.func @transform_1(%arg0: i32, %arg1: i32) -> (i32, i32) {
    %c0_i32 = arith.constant 0 : i32
    %c0_i32_0 = arith.constant 0 : i32
    return %c0_i32, %arg1 : i32, i32
  }
  func.func @transform_2(%arg0: i32, %arg1: i32) -> (i32, i32) {
    %c0_i32 = arith.constant 0 : i32
    %c0_i32_0 = arith.constant 0 : i32
    return %arg1, %c0_i32 : i32, i32
  }
  func.func @transform_3(%arg0: i32, %arg1: i32) -> (i32, i32) {
    %c0_i32 = arith.constant 0 : i32
    %c0_i32_0 = arith.constant 0 : i32
    return %arg0, %c0_i32 : i32, i32
  }
}

</mosaic_0001>

<llo_original>
// kernel: tpu_custom_call.1
$region0: #{tpu_custom_call.1}
  #allocation0 [shape = 'u32[]', space=smem, size = 0x4, offset = 0x4, fixed_abs, tag = 'smem constant byte address 0x4 - core index']
  #allocation1 [shape = 'u32[144,128]{1,0:T(1,128)}', space=vmem, size = 0x12000, scoped, tag = 'internal scratch']
  #allocation2 [shape = 'f32[8,32]{1,0:T(8,128)}', space=vmem, size = 0x1000, scoped, tag = 'scratch operand']
  %s0 = inlined_call_operand.vmem [shape: f32[16,32], index: 0, kind: input, shape index: {}]
  %s1 = inlined_call_operand.vmem [shape: f32[32,128], index: 1, kind: input, shape index: {}]
  %s2 = inlined_call_operand.vmem [shape: f32[64,32], index: 2, kind: input, shape index: {}]
  %s3 = inlined_call_operand.hbm [shape: f32[16,32], index: 3, kind: output, shape index: {}]
  %s4 = sld [smem:[#allocation0]]
  $region53: #{tpu_custom_call.1} parent=0
    _
  %s6 = ssub.s32 1, %s4
  %s7 = scalar_select 0, %s6, %s4
  $region1: #{tpu_custom_call.1} parent=0
    #allocation3 [shape = 'u8[8192]{0}', space=vmem, size = 0x2000, scoped, tag = 'output window, operand 0']
    #allocation4 [shape = 's32[2]{0}', space=sflag, size = 0x8, scoped, tag = 'scoped memory for tpu_custom_call.1']
    %8 = vsyncpa [#allocation4], 0
    %s9 = scalar_lea.sflag [#allocation4], 1
    %10 = vsyncpa %s9, 0
    loop: start=0, step=1, limit=4
    $region2: #{tpu_custom_call.1} parent=1 // loop_pre_header
      _
    $region3: #{tpu_custom_call.1} parent=1 // loop_header
      %s12 = sphi 0, %s16
      %p13 = scmp.ge.s32.totalorder %s12, 4
      %s19 = sphi 0, %s31
      %s20 = sphi 0, %s27
      %s21 = sphi 0, %s19
      %s22 = sphi 0, %s20
      %s23 = sphi 0, %s21
      %s24 = sphi 0, %s22
      %s34 = sphi 0, %s36
      %s37 = sphi 0, %s34
      %s38 = sphi 0, %s37
      %s54 = sphi 0, %s38
      %s60 = sphi 0, %s62
      %s63 = sphi 0, %s60
      %s64 = sphi 0, %s63
      %s80 = sphi 0, %s64
      %s86 = sphi 0, %s88
      %s89 = sphi 0, %s86
      %s90 = sphi 0, %s89
      %s106 = sphi 0, %s90
      %s112 = sphi 0, %s114
      %s115 = sphi 0, %s112
      %s116 = sphi 0, %s115
      %s132 = sphi 0, %s116
    $region4: #{tpu_custom_call.1} parent=1 // loop_header_branch
      %15 = sbr.rel (%p13) target = $region8
    $region5: #{tpu_custom_call.1} parent=1 // loop_body
      %s17 = ssub.s32 %s12, 1
      %s18 = ssub.s32 %s12, 2
      %s25 = sadd.s32 1, %s20
      %p26 = scmp.ge.s32.totalorder %s25, 1
      %s27 = scalar_select %p26, 0, %s25
      %s28 = sadd.s32 1, %s19
      %s29 = scalar_select %p26, %s28, %s19
      %p30 = scmp.ge.s32.totalorder %s29, 2
      %s31 = scalar_select %p30, 0, %s29
      %s32 = ssub.s32 %s19, %s31
      %p33 = scmp.eq.s32.totalorder %s32, 0
      %s35 = sadd.s32 %s34, 1
      %s36 = scalar_select %p33, %s34, %s35
      %p39 = pneg %p33
      %p40 = scmp.eq.s32.totalorder %s12, 1
      %p41 = por %p39, %p40
      %p42 = scmp.ne.s32.totalorder %s34, %s37
      %p43 = scmp.eq.s32.totalorder %s12, 0
      %p44 = por %p42, %p43
      %p45 = scmp.ne.s32.totalorder %s34, %s37
      %p46 = scmp.eq.s32.totalorder %s17, 1
      %p47 = por %p45, %p46
      %p48 = scmp.ne.s32.totalorder %s37, %s38
      %p49 = scmp.eq.s32.totalorder %s17, 0
      %p50 = por %p48, %p49
      %p51 = scmp.ne.s32.totalorder %s37, %s38
      %p52 = scmp.eq.s32.totalorder %s18, 1
      %p53 = por %p51, %p52
      %p55 = scmp.ne.s32.totalorder %s38, %s54
      %p56 = scmp.eq.s32.totalorder %s18, 0
      %p57 = por %p55, %p56
      %s58 = ssub.s32 %s20, %s27
      %p59 = scmp.eq.s32.totalorder %s58, 0
      %s61 = sadd.s32 %s60, 1
      %s62 = scalar_select %p59, %s60, %s61
      %p65 = pneg %p59
      %p66 = scmp.eq.s32.totalorder %s12, 1
      %p67 = por %p65, %p66
      %p68 = scmp.ne.s32.totalorder %s60, %s63
      %p69 = scmp.eq.s32.totalorder %s12, 0
      %p70 = por %p68, %p69
      %p71 = scmp.ne.s32.totalorder %s60, %s63
      %p72 = scmp.eq.s32.totalorder %s17, 1
      %p73 = por %p71, %p72
      %p74 = scmp.ne.s32.totalorder %s63, %s64
      %p75 = scmp.eq.s32.totalorder %s17, 0
      %p76 = por %p74, %p75
      %p77 = scmp.ne.s32.totalorder %s63, %s64
      %p78 = scmp.eq.s32.totalorder %s18, 1
      %p79 = por %p77, %p78
      %p81 = scmp.ne.s32.totalorder %s64, %s80
      %p82 = scmp.eq.s32.totalorder %s18, 0
      %p83 = por %p81, %p82
      %s84 = ssub.s32 %s20, %s27
      %p85 = scmp.eq.s32.totalorder %s84, 0
      %s87 = sadd.s32 %s86, 1
      %s88 = scalar_select %p85, %s86, %s87
      %p91 = pneg %p85
      %p92 = scmp.eq.s32.totalorder %s12, 1
      %p93 = por %p91, %p92
      %p94 = scmp.ne.s32.totalorder %s86, %s89
      %p95 = scmp.eq.s32.totalorder %s12, 0
      %p96 = por %p94, %p95
      %p97 = scmp.ne.s32.totalorder %s86, %s89
      %p98 = scmp.eq.s32.totalorder %s17, 1
      %p99 = por %p97, %p98
      %p100 = scmp.ne.s32.totalorder %s89, %s90
      %p101 = scmp.eq.s32.totalorder %s17, 0
      %p102 = por %p100, %p101
      %p103 = scmp.ne.s32.totalorder %s89, %s90
      %p104 = scmp.eq.s32.totalorder %s18, 1
      %p105 = por %p103, %p104
      %p107 = scmp.ne.s32.totalorder %s90, %s106
      %p108 = scmp.eq.s32.totalorder %s18, 0
      %p109 = por %p107, %p108
      %s110 = ssub.s32 %s19, %s31
      %p111 = scmp.eq.s32.totalorder %s110, 0
      %s113 = sadd.s32 %s112, 1
      %s114 = scalar_select %p111, %s112, %s113
      %p117 = pneg %p111
      %p118 = scmp.eq.s32.totalorder %s12, 1
      %p119 = por %p117, %p118
      %p120 = scmp.ne.s32.totalorder %s112, %s115
      %p121 = scmp.eq.s32.totalorder %s12, 0
      %p122 = por %p120, %p121
      %p123 = scmp.ne.s32.totalorder %s112, %s115
      %p124 = scmp.eq.s32.totalorder %s17, 1
      %p125 = por %p123, %p124
      %p126 = scmp.ne.s32.totalorder %s115, %s116
      %p127 = scmp.eq.s32.totalorder %s17, 0
      %p128 = por %p126, %p127
      %p129 = scmp.ne.s32.totalorder %s115, %s116
      %p130 = scmp.eq.s32.totalorder %s18, 1
      %p131 = por %p129, %p130
      %p133 = scmp.ne.s32.totalorder %s116, %s132
      %p134 = scmp.eq.s32.totalorder %s18, 0
      %p135 = por %p133, %p134
      %p136 = scmp.le.s32.totalorder 1, %s12
      %p137 = scmp.lt.s32.totalorder %s12, 3
      %p138 = pnand %p136, %p137
      %p139 = pneg %p138
      // Predicated region
      $region9: #{tpu_custom_call.1} parent=5 // pred_check
        _
      $region10: #{tpu_custom_call.1} parent=5 // pred_check_branch
        %141 = sbr.rel (%p138) target = $region12
      $region11: #{tpu_custom_call.1} parent=5 // pred_region
        %s142 = ssub.s32 %s12, 1
        // Predicated region
        $region13: #{tpu_custom_call.1} parent=11 // pred_check
          %p143 = pneg %p76
        $region14: #{tpu_custom_call.1} parent=11 // pred_check_branch
          %145 = sbr.rel (%p143) target = $region16
        $region15: #{tpu_custom_call.1} parent=11 // pred_region
          %p146 = scmp.lt.s32.totalorder %s22, 0
          %s147 = scalar_select %p146, %s22, 0
          %s148 = smul.addr %s147, 8
          %s149 = scalar_lea.vmem %s1, %s148
        $region16: #{tpu_custom_call.1} parent=11 // pred_fallthru
          _
        // Predicated region
        $region17: #{tpu_custom_call.1} parent=11 // pred_check
          %p150 = pneg %p102
        $region18: #{tpu_custom_call.1} parent=11 // pred_check_branch
          %152 = sbr.rel (%p150) target = $region20
        $region19: #{tpu_custom_call.1} parent=11 // pred_region
          %s153 = smul.u32 8, %s22
          %p154 = scmp.lt.s32.totalorder %s153, 7
          %s155 = scalar_select %p154, %s153, 7
          %s156 = smul.addr %s155, 8
          %s157 = scalar_lea.vmem %s2, %s156
          %s158 = smul.u32 8, %s22
        $region20: #{tpu_custom_call.1} parent=11 // pred_fallthru
          _
      $region12: #{tpu_custom_call.1} parent=5 // pred_fallthru
        _
      %p159 = scmp.lt.s32.totalorder %s12, 2
      // Predicated region
      $region21: #{tpu_custom_call.1} parent=5 // pred_check
        %p160 = pneg %p159
      $region22: #{tpu_custom_call.1} parent=5 // pred_check_branch
        %162 = sbr.rel (%p160) target = $region24
      $region23: #{tpu_custom_call.1} parent=5 // pred_region
        // Predicated region
        $region25: #{tpu_custom_call.1} parent=23 // pred_check
          %p163 = pneg %p44
        $region26: #{tpu_custom_call.1} parent=23 // pred_check_branch
          %165 = sbr.rel (%p163) target = $region28
        $region27: #{tpu_custom_call.1} parent=23 // pred_region
          %p166 = scmp.lt.s32.totalorder %s19, 1
          %s167 = scalar_select %p166, %s19, 1
          %s168 = smul.addr %s167, 8
          %s169 = scalar_lea.vmem %s0, %s168
        $region28: #{tpu_custom_call.1} parent=23 // pred_fallthru
          _
      $region24: #{tpu_custom_call.1} parent=5 // pred_fallthru
        _
      %p170 = scmp.le.s32.totalorder 1, %s12
      %p171 = scmp.lt.s32.totalorder %s12, 3
      %p172 = pnand %p170, %p171
      %p173 = pneg %p172
      // Predicated region
      $region29: #{tpu_custom_call.1} parent=5 // pred_check
        _
      $region30: #{tpu_custom_call.1} parent=5 // pred_check_branch
        %175 = sbr.rel (%p172) target = $region32
      $region31: #{tpu_custom_call.1} parent=5 // pred_region
        %s176 = ssub.s32 %s12, 1
        %p177 = scmp.lt.s32.totalorder %s21, 1
        %s178 = scalar_select %p177, %s21, 1
        %s179 = smul.addr %s178, 8
        %s180 = scalar_lea.vmem %s0, %s179
        %p181 = pneg %p50
        %p182 = pneg %p47
        %p183 = scmp.lt.s32.totalorder %s22, 0
        %s184 = scalar_select %p183, %s22, 0
        %s185 = smul.addr %s184, 8
        %s186 = scalar_lea.vmem %s1, %s185
        %p187 = pneg %p76
        %p188 = pneg %p73
        %s189 = smul.u32 8, %s22
        %p190 = scmp.lt.s32.totalorder %s189, 7
        %s191 = scalar_select %p190, %s189, 7
        %s192 = smul.addr %s191, 8
        %s193 = scalar_lea.vmem %s2, %s192
        %p194 = pneg %p102
        %p195 = pneg %p99
        %p196 = pneg %p128
        %p197 = pneg %p125
        %s198 = sand.u32 %s115, 1
        %s199 = scalar_lea.sflag [#allocation4], %s198
        %s200 = sand.u32 %s115, 1
        %s201 = smul.addr %s200, 8
        %s202 = scalar_lea.vmem [#allocation3], %s201
        %p203 = scmp.lt.s32.totalorder %s21, 1
        %s204 = scalar_select %p203, %s21, 1
        %s205 = smul.addr %s204, 8
        %s206 = scalar_lea.vmem %s0, %s205
        %p207 = scmp.lt.s32.totalorder %s22, 0
        %s208 = scalar_select %p207, %s22, 0
        %s209 = smul.addr %s208, 8
        %s210 = scalar_lea.vmem %s1, %s209
        %s211 = smul.u32 8, %s22
        %p212 = scmp.lt.s32.totalorder %s211, 7
        %s213 = scalar_select %p212, %s211, 7
        %s214 = smul.addr %s213, 8
        %s215 = scalar_lea.vmem %s2, %s214
        %s216 = smul.u32 8, %s22
        %p217 = scmp.eq.s32.totalorder %s22, 0
        // Predicated region
        $region33: #{tpu_custom_call.1} parent=31 // pred_check
          %p218 = pneg %p217
        $region34: #{tpu_custom_call.1} parent=31 // pred_check_branch
          %220 = sbr.rel (%p218) target = $region36
        $region35: #{tpu_custom_call.1} parent=31 // pred_region
          %vm221 = vcmask 261120
          %222 = vst.msk [vmem:[#allocation2] sm:$0xff] %vm221, 0.0
        $region36: #{tpu_custom_call.1} parent=31 // pred_fallthru
          _
        %v223 = vld [vmem:[%s206] sm:$0xff]
        %v224 = vld [vmem:[%s210] sm:$0xff]
        %v225 = vld [vmem:[%s210 + $0x8] sm:$0xff]
        %v226 = vld [vmem:[%s210 + $0x10] sm:$0xff]
        %v227 = vld [vmem:[%s210 + $0x18] sm:$0xff]
        %vm228 = vcmask 261120
        %v230 = vsel %vm228, %v223, 0
        %232 = vmatprep.subr.mxu0 0.0
        %233 = vmatpush1.msra.mxu0 0.0
        %234 = vmatprep.subr.mxu0 0.0
        %235 = vmatpush1.msra.mxu0 0.0
        %236 = vmatprep.subr.mxu0 0.0
        %237 = vmatpush1.msra.mxu0 0.0
        %238 = vmatprep.subr.mxu0 0.0
        %239 = vmatpush1.msra.mxu0 0.0
        %240 = vmatprep.subr.mxu0 0.0
        %241 = vmatpush1.msra.mxu0 0.0
        %242 = vmatprep.subr.mxu0 0.0
        %243 = vmatpush1.msra.mxu0 0.0
        %244 = vmatprep.subr.mxu0 0.0
        %245 = vmatpush1.msra.mxu0 0.0
        %246 = vmatprep.subr.mxu0 0.0
        %247 = vmatpush1.msra.mxu0 0.0
        %248 = vmatprep.subr.mxu0 0.0
        %249 = vmatpush1.msra.mxu0 0.0
        %250 = vmatprep.subr.mxu0 0.0
        %251 = vmatpush1.msra.mxu0 0.0
        %252 = vmatprep.subr.mxu0 0.0
        %253 = vmatpush1.msra.mxu0 0.0
        %254 = vmatprep.subr.mxu0 0.0
        %255 = vmatpush1.msra.mxu0 0.0
        %256 = vmatprep.subr.mxu0 0.0
        %257 = vmatpush1.msra.mxu0 %v227
        %258 = vmatprep.subr.mxu0 0.0
        %259 = vmatpush1.msra.mxu0 %v226
        %260 = vmatprep.subr.mxu0 0.0
        %261 = vmatpush1.msra.mxu0 %v225
        %262 = vmatprep.subr.mxu0 0.0
        %263 = vmatpush1.msra.mxu0 %v224
        %264 = vmatprep.subr.mxu0 0.0
        %265 = vmatpush2.msra.mxu0 0.0
        %266 = vmatprep.subr.mxu0 0.0
        %267 = vmatpush2.msra.mxu0 0.0
        %268 = vmatprep.subr.mxu0 0.0
        %269 = vmatpush2.msra.mxu0 0.0
        %270 = vmatprep.subr.mxu0 0.0
        %271 = vmatpush2.msra.mxu0 0.0
        %272 = vmatprep.subr.mxu0 0.0
        %273 = vmatpush2.msra.mxu0 0.0
        %274 = vmatprep.subr.mxu0 0.0
        %275 = vmatpush2.msra.mxu0 0.0
        %276 = vmatprep.subr.mxu0 0.0
        %277 = vmatpush2.msra.mxu0 0.0
        %278 = vmatprep.subr.mxu0 0.0
        %279 = vmatpush2.msra.mxu0 0.0
        %280 = vmatprep.subr.mxu0 0.0
        %281 = vmatpush2.msra.mxu0 0.0
        %282 = vmatprep.subr.mxu0 0.0
        %283 = vmatpush2.msra.mxu0 0.0
        %284 = vmatprep.subr.mxu0 0.0
        %285 = vmatpush2.msra.mxu0 0.0
        %286 = vmatprep.subr.mxu0 0.0
        %287 = vmatpush2.msra.mxu0 0.0
        %288 = vmatprep.subr.mxu0 0.0
        %289 = vmatpush2.msra.mxu0 0.0
        %290 = vmatprep.subr.mxu0 0.0
        %291 = vmatpush2.msra.mxu0 0.0
        %292 = vmatprep.subr.mxu0 0.0
        %293 = vmatpush2.msra.mxu0 0.0
        %294 = vmatprep.subr.mxu0 0.0
        %295 = vmatpush2.msra.mxu0 0.0
        %296 = vmatprep.mubr.f32.mxu0 0.0
        %297 = vmatmul.mubr.f32.gmra.mxu0 %v230
        %v298 = vpop.f32.mrf.mxu0
        %v299 = vadd.f32 0.0, %v298
        %v300 = vpop.f32.mrf.mxu0
        %301 = vdwg.mxu0
        %v302 = vmax.f32 %v299, 0.0
        %304 = vrot.lane.b32.xlu0 %v299, 64
        %v305 = vpop.permute.xlu0 %304
        %v307 = vmul.f32 %v302, %v305
        %v308 = vld [vmem:[#allocation2] sm:$0xff]
        %v309 = vld [vmem:[%s215] sm:$0xff]
        %v310 = vld [vmem:[%s215 + $0x8] sm:$0xff]
        %v311 = vld [vmem:[%s215 + $0x10] sm:$0xff]
        %v312 = vld [vmem:[%s215 + $0x18] sm:$0xff]
        %v313 = vld [vmem:[%s215 + $0x20] sm:$0xff]
        %v314 = vld [vmem:[%s215 + $0x28] sm:$0xff]
        %v315 = vld [vmem:[%s215 + $0x30] sm:$0xff]
        %v316 = vld [vmem:[%s215 + $0x38] sm:$0xff]
        %vm317 = vcmask 523264
        %v319 = vsel %vm317, %v307, 0
        %321 = vmatprep.subr.mxu0 0.0
        %322 = vmatpush1.msra.mxu0 0.0
        %323 = vmatprep.subr.mxu0 0.0
        %324 = vmatpush1.msra.mxu0 0.0
        %325 = vmatprep.subr.mxu0 0.0
        %326 = vmatpush1.msra.mxu0 0.0
        %327 = vmatprep.subr.mxu0 0.0
        %328 = vmatpush1.msra.mxu0 0.0
        %329 = vmatprep.subr.mxu0 0.0
        %330 = vmatpush1.msra.mxu0 0.0
        %331 = vmatprep.subr.mxu0 0.0
        %332 = vmatpush1.msra.mxu0 0.0
        %333 = vmatprep.subr.mxu0 0.0
        %334 = vmatpush1.msra.mxu0 0.0
        %335 = vmatprep.subr.mxu0 0.0
        %336 = vmatpush1.msra.mxu0 0.0
        %337 = vmatprep.subr.mxu0 0.0
        %338 = vmatpush1.msra.mxu0 %v316
        %339 = vmatprep.subr.mxu0 0.0
        %340 = vmatpush1.msra.mxu0 %v315
        %341 = vmatprep.subr.mxu0 0.0
        %342 = vmatpush1.msra.mxu0 %v314
        %343 = vmatprep.subr.mxu0 0.0
        %344 = vmatpush1.msra.mxu0 %v313
        %345 = vmatprep.subr.mxu0 0.0
        %346 = vmatpush1.msra.mxu0 %v312
        %347 = vmatprep.subr.mxu0 0.0
        %348 = vmatpush1.msra.mxu0 %v311
        %349 = vmatprep.subr.mxu0 0.0
        %350 = vmatpush1.msra.mxu0 %v310
        %351 = vmatprep.subr.mxu0 0.0
        %352 = vmatpush1.msra.mxu0 %v309
        %353 = vmatprep.subr.mxu0 0.0
        %354 = vmatpush2.msra.mxu0 0.0
        %355 = vmatprep.subr.mxu0 0.0
        %356 = vmatpush2.msra.mxu0 0.0
        %357 = vmatprep.subr.mxu0 0.0
        %358 = vmatpush2.msra.mxu0 0.0
        %359 = vmatprep.subr.mxu0 0.0
        %360 = vmatpush2.msra.mxu0 0.0
        %361 = vmatprep.subr.mxu0 0.0
        %362 = vmatpush2.msra.mxu0 0.0
        %363 = vmatprep.subr.mxu0 0.0
        %364 = vmatpush2.msra.mxu0 0.0
        %365 = vmatprep.subr.mxu0 0.0
        %366 = vmatpush2.msra.mxu0 0.0
        %367 = vmatprep.subr.mxu0 0.0
        %368 = vmatpush2.msra.mxu0 0.0
        %369 = vmatprep.subr.mxu0 0.0
        %370 = vmatpush2.msra.mxu0 0.0
        %371 = vmatprep.subr.mxu0 0.0
        %372 = vmatpush2.msra.mxu0 0.0
        %373 = vmatprep.subr.mxu0 0.0
        %374 = vmatpush2.msra.mxu0 0.0
        %375 = vmatprep.subr.mxu0 0.0
        %376 = vmatpush2.msra.mxu0 0.0
        %377 = vmatprep.subr.mxu0 0.0
        %378 = vmatpush2.msra.mxu0 0.0
        %379 = vmatprep.subr.mxu0 0.0
        %380 = vmatpush2.msra.mxu0 0.0
        %381 = vmatprep.subr.mxu0 0.0
        %382 = vmatpush2.msra.mxu0 0.0
        %383 = vmatprep.subr.mxu0 0.0
        %384 = vmatpush2.msra.mxu0 0.0
        %385 = vmatprep.mubr.f32.mxu0 0.0
        %386 = vmatmul.mubr.f32.gmra.mxu0 %v319
        %v387 = vpop.f32.mrf.mxu0
        %v388 = vadd.f32 0.0, %v387
        %v389 = vpop.f32.mrf.mxu0
        %390 = vdwg.mxu0
        %v391 = vadd.f32 %v308, %v388
        %392 = vst.msk [vmem:[#allocation2] sm:$0xff] %vm228, %v391
        // Predicated region
        $region37: #{tpu_custom_call.1} parent=31 // pred_check
          %p393 = pneg %p217
        $region38: #{tpu_custom_call.1} parent=31 // pred_check_branch
          %395 = sbr.rel (%p393) target = $region40
        $region39: #{tpu_custom_call.1} parent=31 // pred_region
          %v396 = vld [vmem:[#allocation2] sm:$0xff]
          %397 = vst.msk [vmem:[%s202] sm:$0xff] %vm228, %v396
        $region40: #{tpu_custom_call.1} parent=31 // pred_fallthru
          _
        %s398 = sand.u32 %s115, 1
        %s399 = scalar_lea.sflag [#allocation4], %s398
        %s400 = sand.u32 %s115, 1
        %s401 = smul.addr %s400, 8
        %s402 = scalar_lea.vmem [#allocation3], %s401
        // Predicated region
        $region41: #{tpu_custom_call.1} parent=31 // pred_check
          %p403 = pneg %p125
        $region42: #{tpu_custom_call.1} parent=31 // pred_check_branch
          %405 = sbr.rel (%p403) target = $region44
        $region43: #{tpu_custom_call.1} parent=31 // pred_region
          %s407 = ssub.s32 128, 128
          %408 = vsyncadd %s399, %s407
          %s409 = smul.addr %s21, 128
          %s410 = scalar_lea.hbm %s3, %s409
          %s412 = sshll.u32 %s402, 4
          %s413 = int_to_ptr.vmem [resolvable:$true] %s412
          %415 = dma.vmem_to_hbm [thread:$0]  %s413, 128, %s410, %s399
        $region44: #{tpu_custom_call.1} parent=31 // pred_fallthru
          _
      $region32: #{tpu_custom_call.1} parent=5 // pred_fallthru
        _
      %p416 = scmp.le.s32.totalorder 2, %s12
      // Predicated region
      $region45: #{tpu_custom_call.1} parent=5 // pred_check
        %p417 = pneg %p416
      $region46: #{tpu_custom_call.1} parent=5 // pred_check_branch
        %419 = sbr.rel (%p417) target = $region48
      $region47: #{tpu_custom_call.1} parent=5 // pred_region
        %s420 = ssub.s32 %s12, 2
        // Predicated region
        $region49: #{tpu_custom_call.1} parent=47 // pred_check
          %p421 = pneg %p131
        $region50: #{tpu_custom_call.1} parent=47 // pred_check_branch
          %423 = sbr.rel (%p421) target = $region52
        $region51: #{tpu_custom_call.1} parent=47 // pred_region
          %s424 = sand.u32 %s116, 1
          %s425 = scalar_lea.sflag [#allocation4], %s424
          %s426 = sand.u32 %s116, 1
          %s427 = smul.addr %s426, 8
          %s428 = scalar_lea.vmem [#allocation3], %s427
          %429 = dma.done %s425, 128
        $region52: #{tpu_custom_call.1} parent=47 // pred_fallthru
          _
      $region48: #{tpu_custom_call.1} parent=5 // pred_fallthru
        _
    $region6: #{tpu_custom_call.1} parent=1 // loop_footer
      %s16 = sadd.s32 1, %s12
    $region7: #{tpu_custom_call.1} parent=1 // loop_footer_branch
      %11 = sbr.rel target = $region3
    $region8: #{tpu_custom_call.1} parent=1 // loop_exit
      _
    %430 = vsyncpa [#allocation4], 1
    %s431 = scalar_lea.sflag [#allocation4], 1
    %432 = vsyncpa %s431, 1

</llo_original>
